<compile_context>
chip_gen: v7x
topology: tpu7x:2x2x1
jax: 0.10.0
libtpu: 0.0.40
codegen_flags: <defaults>
</compile_context>

<pallas_src>
import functools

import jax
import jax.numpy as jnp
import numpy as np
from jax import lax
from jax.experimental import pallas as pl
from jax.experimental.pallas import tpu as pltpu


def object_neck_gru_kernel(x_ref, wp_ref, sel_ref, wblk_ref, zg_ref, obj_ref,
                           *, num_heads, scale, l2_eps=1e-12):
    bt, t, c = x_ref.shape
    o = wp_ref.shape[1]
    oh = o // num_heads                       # channels per head of obj_attn
    inv_scale = 1.0 / float(scale)

    x = x_ref[...].astype(jnp.float32)                           # (bt, T, C)

    # proj (bias-free 1x1 conv): ONE (bt*T, C) @ (C, O) MXU matmul.
    zx = jnp.dot(x.reshape(bt * t, c), wp_ref[...],
                 preferred_element_type=jnp.float32).reshape(bt, t, o)

    # z_g = proj(adaptive_avg_pool(x)) == mean_T(proj(x))  (conv is linear).
    # Single (bt, O) store; wrapper reshapes to (B, O, 1) (layout-free).
    zg_ref[...] = jnp.mean(zx, axis=1).astype(zg_ref.dtype)

    # L2-normalize over channels (F.normalize, eps=1e-12), fold in 1/scale,
    # then softmax over the token axis T.
    ssq = jnp.sum(zx * zx, axis=-1, keepdims=True)               # (bt, T, 1)
    a = zx * (lax.rsqrt(jnp.maximum(ssq, l2_eps * l2_eps)) * inv_scale)
    a = a - jnp.max(a, axis=1, keepdims=True)
    e = jnp.exp(a)
    s = jnp.sum(e, axis=1, keepdims=True)                        # (bt, 1, O)
    r = pl.reciprocal(s, approx=True)                            # EUP slot
    r = r * (2.0 - s * r)                                        # 1 Newton step
    p = e * r                                                    # (bt, T, O)

    # Token pooling.  full[b, r, o] = sum_t x[b, t, r] * p[b, t, o]; one
    # batched MXU matmul.  Explicit swapaxes -> idle XLU (proven lowering).
    x_cm = jnp.swapaxes(x, 1, 2)                                 # (bt, C, T)
    full = jnp.einsum("bct,bto->bco", x_cm, p,
                      preferred_element_type=jnp.float32)        # (bt, C, O)

    # Head-block-diagonal pick with host-precomputed masks, lane-concatenated
    # (colv[b, q*C + c] = full[b, c, head(c)*O/H + q]).  No iota/compare here.
    colv = jnp.concatenate(
        [jnp.sum(full * sel_ref[q][None], axis=-1) for q in range(oh)],
        axis=-1)                                                 # (bt, oh*C)

    # Fused proj_obj: ONE (bt, oh*C) @ (oh*C, oh*O) MXU push against the
    # precomputed block-diagonal weight -> result is the lane-dense output.
    obj_ref[...] = jnp.dot(colv, wblk_ref[...],
                           preferred_element_type=jnp.float32
                           ).astype(obj_ref.dtype)               # (bt, oh*O)


def prepare_params(wp, wo, *, num_heads):
    """One-time parameter prep (outside the hot path).

    Returns:
      wp_t : (C, O)         pre-transposed proj weight
      sel  : (O/H, C, O)    head-block-diagonal selection masks (f32 0/1)
      wblk : (O/H*C, O/H*O) block-diagonal proj_obj weight, kron(I, W_obj^T)
    """
    o, c = wp.shape
    oh = o // num_heads
    ch = c // num_heads
    wp_t = jnp.transpose(wp).astype(jnp.float32)
    cc = np.arange(c)[:, None]
    oo = np.arange(o)[None, :]
    sel = np.stack([(oo == (cc // ch) * oh + q) for q in range(oh)], axis=0)
    sel = jnp.asarray(sel, jnp.float32)
    wblk = jnp.kron(jnp.eye(oh, dtype=jnp.float32),
                    jnp.transpose(wo).astype(jnp.float32))
    return wp_t, sel, wblk


def _pick_block_b(b, t, c, o, oh):
    """Largest batch block whose live f32 working set fits comfortably in VMEM.

    One grid step holds x (double-buffered by the pipeline), zx/e/p, the
    (C,T) copy, full, colv and both outputs in f32.  Cap at ~24 MiB so the
    kernel stays under v7x's 32 MiB default scoped limit (64 MiB physical);
    v5e/v6e have more VMEM so the same cap is safe there too.  Sub-batch
    blocks must keep the 2-D output blocks sublane-aligned (multiple of 8)
    unless they cover the whole batch.
    """
    per_row = 4 * (3 * t * c + 4 * t * o + 2 * c * o + oh * c + (1 + oh) * o)
    budget = 24 << 20
    fitting = [d for d in range(1, b + 1)
               if b % d == 0 and (d == b or d % 8 == 0)
               and d * per_row <= budget]
    return max(fitting) if fitting else b


@functools.partial(jax.jit, static_argnames=("num_heads", "scale", "block_b"))
def object_neck_gru_forward(x, wp_t, sel, wblk, *, num_heads=8, scale=1.0,
                            block_b=None):
    """x: (B, T, C); wp_t/sel/wblk: outputs of prepare_params."""
    b, t, c = x.shape
    o = wp_t.shape[1]
    oh = o // num_heads
    assert c % num_heads == 0 and o % num_heads == 0
    bt = _pick_block_b(b, t, c, o, oh) if block_b is None else block_b
    assert b % bt == 0

    kernel = functools.partial(object_neck_gru_kernel,
                               num_heads=num_heads, scale=scale)

    zg, obj = pl.pallas_call(
        kernel,
        out_shape=(jax.ShapeDtypeStruct((b, o), jnp.float32),
                   jax.ShapeDtypeStruct((b, oh * o), jnp.float32)),
        grid=(b // bt,),
        in_specs=[
            pl.BlockSpec((bt, t, c), lambda i: (i, 0, 0)),        # x
            pl.BlockSpec((c, o), lambda i: (0, 0)),               # W_proj^T
            pl.BlockSpec((oh, c, o), lambda i: (0, 0, 0)),        # head masks
            pl.BlockSpec((oh * c, oh * o), lambda i: (0, 0)),     # blockdiag Wobj^T
        ],
        out_specs=(
            pl.BlockSpec((bt, o), lambda i: (i, 0)),              # z_g
            pl.BlockSpec((bt, oh * o), lambda i: (i, 0)),         # obj (lane=128)
        ),
        # Shards the batch axis across v7x's 2 TensorCores only when the grid
        # has >= 2 steps (block_b < B); harmless at grid=(1,) / on 1-TC chips.
        compiler_params=pltpu.CompilerParams(
            dimension_semantics=("parallel",)),
    )(x, wp_t, sel, wblk)

    z_g = jnp.reshape(zg, (b, o, 1))                    # layout-free
    obj_val = jnp.transpose(jnp.reshape(obj, (b, oh, o)), (0, 2, 1))  # tiny
    return z_g, obj_val


def reference_forward(x, wp, wo, *, num_heads=8, scale=1.0, l2_eps=1e-12):
    """Pure-JAX mirror of the PyTorch ObjectNeck_GRU.forward (num_layers=1)."""
    b, t, c = x.shape
    o = wp.shape[0]
    xt = jnp.transpose(x, (0, 2, 1))                             # (B, C, T)
    x_pool = jnp.mean(xt, axis=2, keepdims=True)                 # (B, C, 1)
    z = jnp.einsum("oc,bct->bot", wp,
                   jnp.concatenate([x_pool, xt], axis=2))        # (B, O, 1+T)
    z_g, obj_attn = z[:, :, :1], z[:, :, 1:]
    nrm = jnp.sqrt(jnp.sum(obj_attn * obj_attn, axis=1, keepdims=True))
    obj_attn = obj_attn / jnp.maximum(nrm, l2_eps)               # F.normalize
    obj_attn = obj_attn / scale
    obj_attn = jax.nn.softmax(obj_attn, axis=2)                  # over T
    oh = o // num_heads
    ch = c // num_heads
    a4 = obj_attn.reshape(b, num_heads, oh, t)
    x4 = xt.reshape(b, num_heads, ch, t)
    obj_val = jnp.einsum("bhct,bhot->bhco", x4, a4).reshape(b, c, oh)
    obj_val = jnp.einsum("oc,bcj->boj", wo, obj_val)             # proj_obj
    return z_g, obj_val


if __name__ == "__main__":
    # Small shapes consistent with the module: in_channels = out_channels = 32
    # (divisible by num_heads=8), T = 16 tokens, batch = 2, num_layers = 1.
    B, T, C = 2, 16, 32
    OUT_CHANNELS = 32
    NUM_HEADS = 8
    SCALE = 1.0

    root = jax.random.PRNGKey(0)
    kx, kp, ko = jax.random.split(root, 3)
    x = jax.random.normal(kx, (B, T, C), jnp.float32)
    wp = jax.random.normal(kp, (OUT_CHANNELS, C), jnp.float32) * 0.05  # proj
    wo = jax.random.normal(ko, (OUT_CHANNELS, C), jnp.float32) * 0.05  # proj_obj

    # One-time parameter prep (free): transposed proj weight, head-selection
    # masks, block-diagonal proj_obj weight.
    wp_t, sel, wblk = prepare_params(wp, wo, num_heads=NUM_HEADS)

    z_g, obj_val = object_neck_gru_forward(x, wp_t, sel, wblk,
                                           num_heads=NUM_HEADS, scale=SCALE)
    z_g = jax.block_until_ready(z_g)
    obj_val = jax.block_until_ready(obj_val)

    zg_ref, obj_ref = reference_forward(x, wp, wo,
                                        num_heads=NUM_HEADS, scale=SCALE)
    zg_ref = jax.block_until_ready(zg_ref)
    obj_ref = jax.block_until_ready(obj_ref)

    assert z_g.shape == (B, OUT_CHANNELS, 1)
    assert obj_val.shape == (B, OUT_CHANNELS, OUT_CHANNELS // NUM_HEADS)
    np.testing.assert_allclose(np.asarray(z_g), np.asarray(zg_ref),
                               rtol=1e-3, atol=1e-4)
    np.testing.assert_allclose(np.asarray(obj_val), np.asarray(obj_ref),
                               rtol=1e-3, atol=1e-4)
    print("KERNEL_OK")
</pallas_src>

<mosaic_0001>
module attributes {stable_mosaic.version = 11 : i64} {
  func.func @object_neck_gru_kernel(%arg0: i32, %arg1: memref<2x16x32xf32, #tpu.memory_space<vmem>>, %arg2: memref<32x32xf32, #tpu.memory_space<vmem>>, %arg3: memref<4x32x32xf32, #tpu.memory_space<vmem>>, %arg4: memref<128x128xf32, #tpu.memory_space<vmem>>, %arg5: memref<2x32xf32, #tpu.memory_space<vmem>>, %arg6: memref<2x128xf32, #tpu.memory_space<vmem>>) attributes {dimension_semantics = [#tpu.dimension_semantics<parallel>], iteration_bounds = array<i64: 1>, scalar_prefetch = 0 : i64, scratch_operands = 0 : i64, tpu.core_type = #tpu.core_type<tc>, window_params = [{transform_indices = @transform_0, window_bounds = array<i64: 2, 16, 32>}, {pipeline_mode = #tpu.pipeline_mode<synchronous>, transform_indices = @transform_1, window_bounds = array<i64: 32, 32>}, {pipeline_mode = #tpu.pipeline_mode<synchronous>, transform_indices = @transform_2, window_bounds = array<i64: 4, 32, 32>}, {pipeline_mode = #tpu.pipeline_mode<synchronous>, transform_indices = @transform_3, window_bounds = array<i64: 128, 128>}, {transform_indices = @transform_4, window_bounds = array<i64: 2, 32>}, {transform_indices = @transform_5, window_bounds = array<i64: 2, 128>}]} {
    %c0 = arith.constant 0 : index
    %c0_0 = arith.constant 0 : index
    %c0_1 = arith.constant 0 : index
    %0 = vector.load %arg1[%c0, %c0_0, %c0_1] : memref<2x16x32xf32, #tpu.memory_space<vmem>>, vector<2x16x32xf32>
    %1 = vector.shape_cast %0 : vector<2x16x32xf32> to vector<32x32xf32>
    %c0_2 = arith.constant 0 : index
    %c0_3 = arith.constant 0 : index
    %2 = vector.load %arg2[%c0_2, %c0_3] : memref<32x32xf32, #tpu.memory_space<vmem>>, vector<32x32xf32>
    %cst = arith.constant dense<0.000000e+00> : vector<32x32xf32>
    %3 = tpu.matmul %1, %2, %cst {dimension_numbers = #tpu.dot_dimension_numbers<[1], [0], [0], [1], [0, 0, 1, 1], [], []>} : vector<32x32xf32>, vector<32x32xf32>, vector<32x32xf32> -> vector<32x32xf32>
    %4 = vector.shape_cast %3 : vector<32x32xf32> to vector<2x16x32xf32>
    %cst_4 = arith.constant dense<0.000000e+00> : vector<2x32xf32>
    %5 = vector.multi_reduction <add>, %4, %cst_4 [1] : vector<2x16x32xf32> to vector<2x32xf32>
    %cst_5 = arith.constant 1.600000e+01 : f32
    %6 = vector.broadcast %cst_5 : f32 to vector<2x32xf32>
    %7 = arith.divf %5, %6 : vector<2x32xf32>
    %c0_6 = arith.constant 0 : index
    %c0_7 = arith.constant 0 : index
    %8 = vector.load %arg5[%c0_6, %c0_7] : memref<2x32xf32, #tpu.memory_space<vmem>>, vector<2x32xf32>
    tpu.vector_store %arg5[%c0_6, %c0_7], %7 {strides = array<i32>} : memref<2x32xf32, #tpu.memory_space<vmem>>, vector<2x32xf32>,
    %9 = arith.mulf %4, %4 : vector<2x16x32xf32>
    %cst_8 = arith.constant dense<0.000000e+00> : vector<2x16xf32>
    %10 = vector.multi_reduction <add>, %9, %cst_8 [2] : vector<2x16x32xf32> to vector<2x16xf32>
    %11 = vector.shape_cast %10 : vector<2x16xf32> to vector<2x16x1xf32>
    %cst_9 = arith.constant 1.000000e-24 : f32
    %12 = vector.broadcast %cst_9 : f32 to vector<2x16x1xf32>
    %13 = arith.maximumf %11, %12 : vector<2x16x1xf32>
    %14 = math.rsqrt %13 : vector<2x16x1xf32>
    %cst_10 = arith.constant 1.000000e+00 : f32
    %15 = vector.broadcast %cst_10 : f32 to vector<2x16x1xf32>
    %16 = arith.mulf %14, %15 : vector<2x16x1xf32>
    %17 = vector.broadcast %16 : vector<2x16x1xf32> to vector<2x16x32xf32>
    %18 = arith.mulf %4, %17 : vector<2x16x32xf32>
    %cst_11 = arith.constant dense<0xFF800000> : vector<2x32xf32>
    %19 = vector.multi_reduction <maximumf>, %18, %cst_11 [1] : vector<2x16x32xf32> to vector<2x32xf32>
    %20 = vector.shape_cast %19 : vector<2x32xf32> to vector<2x1x32xf32>
    %21 = vector.broadcast %20 : vector<2x1x32xf32> to vector<2x16x32xf32>
    %22 = arith.subf %18, %21 : vector<2x16x32xf32>
    %23 = math.exp %22 : vector<2x16x32xf32>
    %cst_12 = arith.constant dense<0.000000e+00> : vector<2x32xf32>
    %24 = vector.multi_reduction <add>, %23, %cst_12 [1] : vector<2x16x32xf32> to vector<2x32xf32>
    %25 = vector.shape_cast %24 : vector<2x32xf32> to vector<2x1x32xf32>
    %26 = tpu.reciprocal %25 {approx = true} : vector<2x1x32xf32> -> vector<2x1x32xf32>
    %27 = arith.mulf %25, %26 : vector<2x1x32xf32>
    %cst_13 = arith.constant 2.000000e+00 : f32
    %28 = vector.broadcast %cst_13 : f32 to vector<2x1x32xf32>
    %29 = arith.subf %28, %27 : vector<2x1x32xf32>
    %30 = arith.mulf %26, %29 : vector<2x1x32xf32>
    %31 = vector.broadcast %30 : vector<2x1x32xf32> to vector<2x16x32xf32>
    %32 = arith.mulf %23, %31 : vector<2x16x32xf32>
    %33 = tpu.transpose %0, [0, 2, 1] : vector<2x16x32xf32> -> vector<2x32x16xf32>
    "tpu.trace_start"() <{level = 10 : i32, message = "bct,bto->bco"}> : () -> ()
    %cst_14 = arith.constant dense<0.000000e+00> : vector<2x32x32xf32>
    %34 = tpu.matmul %33, %32, %cst_14 {dimension_numbers = #tpu.dot_dimension_numbers<[2], [1], [1], [2], [0, 0, 0, 1, 1, 2], [0], [0]>} : vector<2x32x16xf32>, vector<2x16x32xf32>, vector<2x32x32xf32> -> vector<2x32x32xf32>
    "tpu.trace_stop"() : () -> ()
    %c0_15 = arith.constant 0 : index
    %c0_16 = arith.constant 0 : index
    %c0_17 = arith.constant 0 : index
    %35 = vector.load %arg3[%c0_15, %c0_16, %c0_17] : memref<4x32x32xf32, #tpu.memory_space<vmem>>, vector<1x32x32xf32>
    %36 = vector.shape_cast %35 : vector<1x32x32xf32> to vector<32x32xf32>
    %37 = vector.shape_cast %36 : vector<32x32xf32> to vector<1x32x32xf32>
    %38 = vector.broadcast %37 : vector<1x32x32xf32> to vector<2x32x32xf32>
    %39 = arith.mulf %34, %38 : vector<2x32x32xf32>
    %cst_18 = arith.constant dense<0.000000e+00> : vector<2x32xf32>
    %40 = vector.multi_reduction <add>, %39, %cst_18 [2] : vector<2x32x32xf32> to vector<2x32xf32>
    %c1 = arith.constant 1 : index
    %c0_19 = arith.constant 0 : index
    %c0_20 = arith.constant 0 : index
    %41 = vector.load %arg3[%c1, %c0_19, %c0_20] : memref<4x32x32xf32, #tpu.memory_space<vmem>>, vector<1x32x32xf32>
    %42 = vector.shape_cast %41 : vector<1x32x32xf32> to vector<32x32xf32>
    %43 = vector.shape_cast %42 : vector<32x32xf32> to vector<1x32x32xf32>
    %44 = vector.broadcast %43 : vector<1x32x32xf32> to vector<2x32x32xf32>
    %45 = arith.mulf %34, %44 : vector<2x32x32xf32>
    %cst_21 = arith.constant dense<0.000000e+00> : vector<2x32xf32>
    %46 = vector.multi_reduction <add>, %45, %cst_21 [2] : vector<2x32x32xf32> to vector<2x32xf32>
    %c2 = arith.constant 2 : index
    %c0_22 = arith.constant 0 : index
    %c0_23 = arith.constant 0 : index
    %47 = vector.load %arg3[%c2, %c0_22, %c0_23] : memref<4x32x32xf32, #tpu.memory_space<vmem>>, vector<1x32x32xf32>
    %48 = vector.shape_cast %47 : vector<1x32x32xf32> to vector<32x32xf32>
    %49 = vector.shape_cast %48 : vector<32x32xf32> to vector<1x32x32xf32>
    %50 = vector.broadcast %49 : vector<1x32x32xf32> to vector<2x32x32xf32>
    %51 = arith.mulf %34, %50 : vector<2x32x32xf32>
    %cst_24 = arith.constant dense<0.000000e+00> : vector<2x32xf32>
    %52 = vector.multi_reduction <add>, %51, %cst_24 [2] : vector<2x32x32xf32> to vector<2x32xf32>
    %c3 = arith.constant 3 : index
    %c0_25 = arith.constant 0 : index
    %c0_26 = arith.constant 0 : index
    %53 = vector.load %arg3[%c3, %c0_25, %c0_26] : memref<4x32x32xf32, #tpu.memory_space<vmem>>, vector<1x32x32xf32>
    %54 = vector.shape_cast %53 : vector<1x32x32xf32> to vector<32x32xf32>
    %55 = vector.shape_cast %54 : vector<32x32xf32> to vector<1x32x32xf32>
    %56 = vector.broadcast %55 : vector<1x32x32xf32> to vector<2x32x32xf32>
    %57 = arith.mulf %34, %56 : vector<2x32x32xf32>
    %cst_27 = arith.constant dense<0.000000e+00> : vector<2x32xf32>
    %58 = vector.multi_reduction <add>, %57, %cst_27 [2] : vector<2x32x32xf32> to vector<2x32xf32>
    %59 = tpu.concatenate %40, %46, %52, %58 in 1 : vector<2x32xf32>, vector<2x32xf32>, vector<2x32xf32>, vector<2x32xf32> -> vector<2x128xf32>
    %c0_28 = arith.constant 0 : index
    %c0_29 = arith.constant 0 : index
    %60 = vector.load %arg4[%c0_28, %c0_29] : memref<128x128xf32, #tpu.memory_space<vmem>>, vector<128x128xf32>
    %cst_30 = arith.constant dense<0.000000e+00> : vector<2x128xf32>
    %61 = tpu.matmul %59, %60, %cst_30 {dimension_numbers = #tpu.dot_dimension_numbers<[1], [0], [0], [1], [0, 0, 1, 1], [], []>} : vector<2x128xf32>, vector<128x128xf32>, vector<2x128xf32> -> vector<2x128xf32>
    %c0_31 = arith.constant 0 : index
    %c0_32 = arith.constant 0 : index
    %62 = vector.load %arg6[%c0_31, %c0_32] : memref<2x128xf32, #tpu.memory_space<vmem>>, vector<2x128xf32>
    tpu.vector_store %arg6[%c0_31, %c0_32], %61 {strides = array<i32>} : memref<2x128xf32, #tpu.memory_space<vmem>>, vector<2x128xf32>,
    return
  }
  func.func @transform_0(%arg0: i32) -> (i32, i32, i32) {
    %c0_i32 = arith.constant 0 : i32
    %c0_i32_0 = arith.constant 0 : i32
    %c0_i32_1 = arith.constant 0 : i32
    return %arg0, %c0_i32, %c0_i32_0 : i32, i32, i32
  }
  func.func @transform_1(%arg0: i32) -> (i32, i32) {
    %c0_i32 = arith.constant 0 : i32
    %c0_i32_0 = arith.constant 0 : i32
    %c0_i32_1 = arith.constant 0 : i32
    return %c0_i32, %c0_i32_0 : i32, i32
  }
  func.func @transform_2(%arg0: i32) -> (i32, i32, i32) {
    %c0_i32 = arith.constant 0 : i32
    %c0_i32_0 = arith.constant 0 : i32
    %c0_i32_1 = arith.constant 0 : i32
    %c0_i32_2 = arith.constant 0 : i32
    return %c0_i32, %c0_i32_0, %c0_i32_1 : i32, i32, i32
  }
  func.func @transform_3(%arg0: i32) -> (i32, i32) {
    %c0_i32 = arith.constant 0 : i32
    %c0_i32_0 = arith.constant 0 : i32
    %c0_i32_1 = arith.constant 0 : i32
    return %c0_i32, %c0_i32_0 : i32, i32
  }
  func.func @transform_4(%arg0: i32) -> (i32, i32) {
    %c0_i32 = arith.constant 0 : i32
    %c0_i32_0 = arith.constant 0 : i32
    return %arg0, %c0_i32 : i32, i32
  }
  func.func @transform_5(%arg0: i32) -> (i32, i32) {
    %c0_i32 = arith.constant 0 : i32
    %c0_i32_0 = arith.constant 0 : i32
    return %arg0, %c0_i32 : i32, i32
  }
}

</mosaic_0001>

<llo_original>
// kernel: object_neck_gru_forward.1
$region0: #{object_neck_gru_forward.1}
  #allocation0 [shape = 'u32[]', space=smem, size = 0x4, offset = 0x4, fixed_abs, tag = 'smem constant byte address 0x4 - core index']
  #allocation1 [shape = 'u32[144,128]{1,0:T(1,128)}', space=vmem, size = 0x12000, scoped, tag = 'internal scratch']
  %s0 = inlined_call_operand.hbm [shape: f32[2,16,32], index: 0, kind: input, shape index: {}]
  %s1 = inlined_call_operand.hbm [shape: f32[32,32], index: 1, kind: input, shape index: {}]
  %s2 = inlined_call_operand.hbm [shape: f32[4,32,32], index: 2, kind: input, shape index: {}]
  %s3 = inlined_call_operand.hbm [shape: f32[128,128], index: 3, kind: input, shape index: {}]
  %s4 = inlined_call_operand.hbm [shape: f32[2,32], index: 4, kind: output, shape index: {0}]
  %s5 = inlined_call_operand.vmem [shape: f32[2,128], index: 5, kind: output, shape index: {1}]
  %6 = xla_tuple %s4, %s5
  %s7 = sld [smem:[#allocation0]]
  $region50: #{object_neck_gru_forward.1} parent=0
    _
  %s9 = ssub.s32 1, %s7
  %s10 = scalar_select 0, %s9, %s7
  $region1: #{object_neck_gru_forward.1} parent=0
    #allocation2 [shape = 'u8[16384]{0}', space=vmem, size = 0x4000, scoped, tag = 'input window, operand 0, single buffered']
    #allocation3 [shape = 's32[1]{0}', space=sflag, size = 0x4, scoped, tag = 'scoped memory for object_neck_gru_forward.1']
    #allocation4 [shape = 's32[1]{0}', space=sflag, size = 0x4, scoped, tag = 'scoped memory for object_neck_gru_forward.1']
    #allocation5 [shape = 'u8[16384]{0}', space=vmem, size = 0x4000, scoped, tag = 'input window, operand 1, single buffered']
    #allocation6 [shape = 's32[1]{0}', space=sflag, size = 0x4, scoped, tag = 'scoped memory for object_neck_gru_forward.1']
    #allocation7 [shape = 'u8[65536]{0}', space=vmem, size = 0x10000, scoped, tag = 'input window, operand 2, single buffered']
    #allocation8 [shape = 'u8[65536]{0}', space=vmem, size = 0x10000, scoped, tag = 'input window, operand 3, single buffered']
    #allocation9 [shape = 's32[1]{0}', space=sflag, size = 0x4, scoped, tag = 'scoped memory for object_neck_gru_forward.1']
    #allocation10 [shape = 'u8[1024]{0}', space=vmem, size = 0x400, scoped, tag = 'output window, operand 0, single buffered']
    %11 = vsyncpa [#allocation3], 0
    %12 = vsyncpa [#allocation6], 0
    %13 = vsyncpa [#allocation9], 0
    %14 = vsyncpa [#allocation4], 0
    // Predicated region
    $region2: #{object_neck_gru_forward.1} parent=1 // pred_check
      _
    $region3: #{object_neck_gru_forward.1} parent=1 // pred_check_branch
      %16 = sbr.rel (0) target = $region5
    $region4: #{object_neck_gru_forward.1} parent=1 // pred_region
      %s18 = ssub.s32 512, 512
      %19 = vsyncadd [#allocation3], %s18
      %s20 = sshll.u32 [#allocation2], 4
      %s21 = int_to_ptr.vmem [resolvable:$true] %s20
      %26 = dma.hbm_to_vmem [thread:$0]  %s0, 512, %s21, [#allocation3], 128, 128, 8
    $region5: #{object_neck_gru_forward.1} parent=1 // pred_fallthru
      _
    // Predicated region
    $region6: #{object_neck_gru_forward.1} parent=1 // pred_check
      _
    $region7: #{object_neck_gru_forward.1} parent=1 // pred_check_branch
      %28 = sbr.rel (0) target = $region9
    $region8: #{object_neck_gru_forward.1} parent=1 // pred_region
      %s30 = ssub.s32 512, 512
      %31 = vsyncadd [#allocation6], %s30
      %s32 = sshll.u32 [#allocation5], 4
      %s33 = int_to_ptr.vmem [resolvable:$true] %s32
      %38 = dma.hbm_to_vmem [thread:$0]  %s1, 512, %s33, [#allocation6], 128, 128, 8
    $region9: #{object_neck_gru_forward.1} parent=1 // pred_fallthru
      _
    // Predicated region
    $region10: #{object_neck_gru_forward.1} parent=1 // pred_check
      _
    $region11: #{object_neck_gru_forward.1} parent=1 // pred_check_branch
      %40 = sbr.rel (0) target = $region13
    $region12: #{object_neck_gru_forward.1} parent=1 // pred_region
      %s42 = ssub.s32 2048, 2048
      %43 = vsyncadd [#allocation6], %s42
      %s44 = sshll.u32 [#allocation7], 4
      %s45 = int_to_ptr.vmem [resolvable:$true] %s44
      %50 = dma.hbm_to_vmem [thread:$0]  %s2, 2048, %s45, [#allocation6], 128, 128, 8
    $region13: #{object_neck_gru_forward.1} parent=1 // pred_fallthru
      _
    // Predicated region
    $region14: #{object_neck_gru_forward.1} parent=1 // pred_check
      _
    $region15: #{object_neck_gru_forward.1} parent=1 // pred_check_branch
      %52 = sbr.rel (0) target = $region17
    $region16: #{object_neck_gru_forward.1} parent=1 // pred_region
      %s54 = ssub.s32 2048, 2048
      %55 = vsyncadd [#allocation9], %s54
      %s56 = sshll.u32 [#allocation8], 4
      %s57 = int_to_ptr.vmem [resolvable:$true] %s56
      %62 = dma.hbm_to_vmem [thread:$0]  %s3, 2048, %s57, [#allocation9], 128, 128, 8
    $region17: #{object_neck_gru_forward.1} parent=1 // pred_fallthru
      _
    // Predicated region
    $region18: #{object_neck_gru_forward.1} parent=1 // pred_check
      _
    $region19: #{object_neck_gru_forward.1} parent=1 // pred_check_branch
      %64 = sbr.rel (0) target = $region21
    $region20: #{object_neck_gru_forward.1} parent=1 // pred_region
      %65 = dma.done [#allocation3], 512
    $region21: #{object_neck_gru_forward.1} parent=1 // pred_fallthru
      _
    // Predicated region
    $region22: #{object_neck_gru_forward.1} parent=1 // pred_check
      _
    $region23: #{object_neck_gru_forward.1} parent=1 // pred_check_branch
      %67 = sbr.rel (0) target = $region25
    $region24: #{object_neck_gru_forward.1} parent=1 // pred_region
      %68 = dma.done [#allocation6], 512
    $region25: #{object_neck_gru_forward.1} parent=1 // pred_fallthru
      _
    // Predicated region
    $region26: #{object_neck_gru_forward.1} parent=1 // pred_check
      _
    $region27: #{object_neck_gru_forward.1} parent=1 // pred_check_branch
      %70 = sbr.rel (0) target = $region29
    $region28: #{object_neck_gru_forward.1} parent=1 // pred_region
      %71 = dma.done [#allocation6], 2048
    $region29: #{object_neck_gru_forward.1} parent=1 // pred_fallthru
      _
    // Predicated region
    $region30: #{object_neck_gru_forward.1} parent=1 // pred_check
      _
    $region31: #{object_neck_gru_forward.1} parent=1 // pred_check_branch
      %73 = sbr.rel (0) target = $region33
    $region32: #{object_neck_gru_forward.1} parent=1 // pred_region
      %74 = dma.done [#allocation9], 2048
    $region33: #{object_neck_gru_forward.1} parent=1 // pred_fallthru
      _
    %v75 = vld [vmem:[#allocation2] sm:$0xff]
    %v76 = vld [vmem:[#allocation2 + $0x8] sm:$0xff]
    %v77 = vld [vmem:[#allocation2 + $0x10] sm:$0xff]
    %v78 = vld [vmem:[#allocation2 + $0x18] sm:$0xff]
    %v79 = vld [vmem:[#allocation5] sm:$0xff]
    %v80 = vld [vmem:[#allocation5 + $0x8] sm:$0xff]
    %v81 = vld [vmem:[#allocation5 + $0x10] sm:$0xff]
    %v82 = vld [vmem:[#allocation5 + $0x18] sm:$0xff]
    %vm83 = vcmask 261120
    %v85 = vsel %vm83, %v75, 0
    %v88 = vsel %vm83, %v76, 0
    %v91 = vsel %vm83, %v77, 0
    %v94 = vsel %vm83, %v78, 0
    %96 = vmatprep.subr.mxu0 0.0
    %97 = vmatpush1.msra.mxu0 %v79
    %98 = vmatprep.subr.mxu0 0.0
    %99 = vmatpush1.msra.mxu0 %v80
    %100 = vmatprep.subr.mxu0 0.0
    %101 = vmatpush1.msra.mxu0 %v81
    %102 = vmatprep.subr.mxu0 0.0
    %103 = vmatpush1.msra.mxu0 %v82
    %104 = vmatprep.subr.mxu0 0.0
    %105 = vmatpush1.msra.mxu0 0.0
    %106 = vmatprep.subr.mxu0 0.0
    %107 = vmatpush1.msra.mxu0 0.0
    %108 = vmatprep.subr.mxu0 0.0
    %109 = vmatpush1.msra.mxu0 0.0
    %110 = vmatprep.subr.mxu0 0.0
    %111 = vmatpush1.msra.mxu0 0.0
    %112 = vmatprep.subr.mxu0 0.0
    %113 = vmatpush1.msra.mxu0 0.0
    %114 = vmatprep.subr.mxu0 0.0
    %115 = vmatpush1.msra.mxu0 0.0
    %116 = vmatprep.subr.mxu0 0.0
    %117 = vmatpush1.msra.mxu0 0.0
    %118 = vmatprep.subr.mxu0 0.0
    %119 = vmatpush1.msra.mxu0 0.0
    %120 = vmatprep.subr.mxu0 0.0
    %121 = vmatpush1.msra.mxu0 0.0
    %122 = vmatprep.subr.mxu0 0.0
    %123 = vmatpush1.msra.mxu0 0.0
    %124 = vmatprep.subr.mxu0 0.0
    %125 = vmatpush1.msra.mxu0 0.0
    %126 = vmatprep.subr.mxu0 0.0
    %127 = vmatpush1.msra.mxu0 0.0
    %128 = vmatprep.subr.mxu0 0.0
    %129 = vmatpush1.msra.mxu0 0.0
    %130 = vmatprep.subr.mxu0 0.0
    %131 = vmatpush1.msra.mxu0 0.0
    %132 = vmatprep.subr.mxu0 0.0
    %133 = vmatpush1.msra.mxu0 0.0
    %134 = vmatprep.subr.mxu0 0.0
    %135 = vmatpush1.msra.mxu0 0.0
    %136 = vmatprep.subr.mxu0 0.0
    %137 = vmatpush1.msra.mxu0 0.0
    %138 = vmatprep.subr.mxu0 0.0
    %139 = vmatpush1.msra.mxu0 0.0
    %140 = vmatprep.subr.mxu0 0.0
    %141 = vmatpush1.msra.mxu0 0.0
    %142 = vmatprep.subr.mxu0 0.0
    %143 = vmatpush1.msra.mxu0 0.0
    %144 = vmatprep.subr.mxu0 0.0
    %145 = vmatpush1.msra.mxu0 0.0
    %146 = vmatprep.subr.mxu0 0.0
    %147 = vmatpush1.msra.mxu0 0.0
    %148 = vmatprep.subr.mxu0 0.0
    %149 = vmatpush1.msra.mxu0 0.0
    %150 = vmatprep.subr.mxu0 0.0
    %151 = vmatpush1.msra.mxu0 0.0
    %152 = vmatprep.subr.mxu0 0.0
    %153 = vmatpush1.msra.mxu0 0.0
    %154 = vmatprep.subr.mxu0 0.0
    %155 = vmatpush1.msra.mxu0 0.0
    %156 = vmatprep.subr.mxu0 0.0
    %157 = vmatpush1.msra.mxu0 0.0
    %158 = vmatprep.subr.mxu0 0.0
    %159 = vmatpush1.msra.mxu0 0.0
    %160 = vmatprep.mubr.f32.mxu0 0.0
    %161 = vmatmul.mubr.f32.gmra.mrb[0].mxu0 %v85
    %v162 = vpop.f32.mrb[0].mxu0
    %v163 = vadd.f32 0.0, %v162
    %v164 = vpop.f32.mrb[0].mxu0
    %165 = vmatprep.mubr.f32.mxu0 0.0
    %166 = vmatmul.mubr.f32.gmra.mrb[0].mxu0 %v88
    %v167 = vpop.f32.mrb[0].mxu0
    %v168 = vadd.f32 0.0, %v167
    %v169 = vpop.f32.mrb[0].mxu0
    %170 = vmatprep.mubr.f32.mxu0 0.0
    %171 = vmatmul.mubr.f32.gmra.mrb[0].mxu0 %v91
    %v172 = vpop.f32.mrb[0].mxu0
    %v173 = vadd.f32 0.0, %v172
    %v174 = vpop.f32.mrb[0].mxu0
    %175 = vmatprep.mubr.f32.mxu0 0.0
    %176 = vmatmul.mubr.f32.gmra.mrb[0].mxu0 %v94
    %v177 = vpop.f32.mrb[0].mxu0
    %v178 = vadd.f32 0.0, %v177
    %v179 = vpop.f32.mrb[0].mxu0
    %180 = vdwg.mxu0
    %v181 = vsel %vm83, %v163, 0.0
    %v182 = vsel %vm83, %v168, 0.0
    %v183 = vadd.f32 %v181, %v182
    %v184 = vrot.slane %v183, 4
    %v185 = vadd.f32 %v183, %v184
    %v186 = vrot.slane %v185, 2
    %v187 = vadd.f32 %v185, %v186
    %v188 = vrot.slane %v187, 1
    %v189 = vadd.f32 %v187, %v188
    %v190 = vsel %vm83, %v173, 0.0
    %v191 = vsel %vm83, %v178, 0.0
    %v192 = vadd.f32 %v190, %v191
    %v193 = vrot.slane %v192, 4
    %v194 = vadd.f32 %v192, %v193
    %v195 = vrot.slane %v194, 2
    %v196 = vadd.f32 %v194, %v195
    %v197 = vrot.slane %v196, 1
    %v198 = vadd.f32 %v196, %v197
    %v199 = vrcp.pop 16.0
    %v200 = vmul.f32 %v189, %v199
    %v201 = vmul.f32 %v198, %v199
    %vm204 = vcmask 1041409
    %v205 = vsel %vm204, %v201, %v200
    %vm207 = vcmask 254976
    %208 = vst.msk [vmem:[#allocation10] sm:$0x3] %vm207, %v205
    %v209 = vmul.f32 %v163, %v163
    %v210 = vmul.f32 %v168, %v168
    %v211 = vmul.f32 %v173, %v173
    %v212 = vmul.f32 %v178, %v178
    %v213 = vsel %vm83, %v209, 0.0
    %214 = vadd.xlane.f32.xlu0 %v213
    %v215 = vpop.xlane.xlu0 %214
    %v216 = vsel %vm83, %v210, 0.0
    %217 = vadd.xlane.f32.xlu0 %v216
    %v218 = vpop.xlane.xlu0 %217
    %v219 = vsel %vm83, %v211, 0.0
    %220 = vadd.xlane.f32.xlu0 %v219
    %v221 = vpop.xlane.xlu0 %220
    %v222 = vsel %vm83, %v212, 0.0
    %223 = vadd.xlane.f32.xlu0 %v222
    %v224 = vpop.xlane.xlu0 %223
    %v225 = vmax.f32 %v215, 1e-24
    %v226 = vmax.f32 %v218, 1e-24
    %v227 = vmax.f32 %v221, 1e-24
    %v228 = vmax.f32 %v224, 1e-24
    %v229 = vrsqrt.pop %v225
    %v230 = vrsqrt.pop %v226
    %v231 = vrsqrt.pop %v227
    %v232 = vrsqrt.pop %v228
    %v233 = vmul.f32 %v163, %v229
    %v234 = vmul.f32 %v168, %v230
    %v235 = vmul.f32 %v173, %v231
    %v236 = vmul.f32 %v178, %v232
    %v237 = vsel %vm83, %v233, -inf
    %v238 = vsel %vm83, %v234, -inf
    %v239 = vmax.f32 %v237, %v238
    %v240 = vrot.slane %v239, 4
    %v241 = vmax.f32 %v239, %v240
    %v242 = vrot.slane %v241, 2
    %v243 = vmax.f32 %v241, %v242
    %v244 = vrot.slane %v243, 1
    %v245 = vmax.f32 %v243, %v244
    %v246 = vsel %vm83, %v235, -inf
    %v247 = vsel %vm83, %v236, -inf
    %v248 = vmax.f32 %v246, %v247
    %v249 = vrot.slane %v248, 4
    %v250 = vmax.f32 %v248, %v249
    %v251 = vrot.slane %v250, 2
    %v252 = vmax.f32 %v250, %v251
    %v253 = vrot.slane %v252, 1
    %v254 = vmax.f32 %v252, %v253
    %v255 = vsub.f32 %v233, %v245
    %v256 = vsub.f32 %v234, %v245
    %v257 = vsub.f32 %v235, %v254
    %v258 = vsub.f32 %v236, %v254
    %v259 = vmul.f32 %v255, 1.442695
    %v260 = vpow.pop %v259
    %v261 = vmul.f32 %v256, 1.442695
    %v262 = vpow.pop %v261
    %v263 = vmul.f32 %v257, 1.442695
    %v264 = vpow.pop %v263
    %v265 = vmul.f32 %v258, 1.442695
    %v266 = vpow.pop %v265
    %v267 = vsel %vm83, %v260, 0.0
    %v268 = vsel %vm83, %v262, 0.0
    %v269 = vadd.f32 %v267, %v268
    %v270 = vrot.slane %v269, 4
    %v271 = vadd.f32 %v269, %v270
    %v272 = vrot.slane %v271, 2
    %v273 = vadd.f32 %v271, %v272
    %v274 = vrot.slane %v273, 1
    %v275 = vadd.f32 %v273, %v274
    %v276 = vsel %vm83, %v264, 0.0
    %v277 = vsel %vm83, %v266, 0.0
    %v278 = vadd.f32 %v276, %v277
    %v279 = vrot.slane %v278, 4
    %v280 = vadd.f32 %v278, %v279
    %v281 = vrot.slane %v280, 2
    %v282 = vadd.f32 %v280, %v281
    %v283 = vrot.slane %v282, 1
    %v284 = vadd.f32 %v282, %v283
    %v285 = vrcp.pop %v275
    %v286 = vrcp.pop %v284
    %v287 = vmul.f32 %v275, %v285
    %v288 = vmul.f32 %v284, %v286
    %v289 = vsub.f32 2.0, %v287
    %v290 = vsub.f32 2.0, %v288
    %v291 = vmul.f32 %v285, %v289
    %v292 = vmul.f32 %v286, %v290
    %v293 = vmul.f32 %v260, %v291
    %v294 = vmul.f32 %v262, %v291
    %v295 = vmul.f32 %v264, %v292
    %v296 = vmul.f32 %v266, %v292
    %297 = vxpose.xlu0.b32.start [1/16] %v75, 128
    %298 = vxpose.xlu0.b32.cont [2/16] %v76, 128
    %299 = vxpose.xlu0.b32.cont [3/16] 0.0, 128
    %300 = vxpose.xlu0.b32.cont [4/16] 0.0, 128
    %301 = vxpose.xlu0.b32.cont [5/16] 0.0, 128
    %302 = vxpose.xlu0.b32.cont [6/16] 0.0, 128
    %303 = vxpose.xlu0.b32.cont [7/16] 0.0, 128
    %304 = vxpose.xlu0.b32.cont [8/16] 0.0, 128
    %305 = vxpose.xlu0.b32.cont [9/16] 0.0, 128
    %306 = vxpose.xlu0.b32.cont [10/16] 0.0, 128
    %307 = vxpose.xlu0.b32.cont [11/16] 0.0, 128
    %308 = vxpose.xlu0.b32.cont [12/16] 0.0, 128
    %309 = vxpose.xlu0.b32.cont [13/16] 0.0, 128
    %310 = vxpose.xlu0.b32.cont [14/16] 0.0, 128
    %311 = vxpose.xlu0.b32.cont [15/16] 0.0, 128
    %312 = vxpose.xlu0.b32.end [16/16] 0.0, 128
    %v313 = vpop.trf.xlu0
    %v314 = vpop.trf.xlu0
    %v315 = vpop.trf.xlu0
    %v316 = vpop.trf.xlu0
    %v317 = vpop.trf.xlu0
    %v318 = vpop.trf.xlu0
    %v319 = vpop.trf.xlu0
    %v320 = vpop.trf.xlu0
    %v321 = vpop.trf.xlu0
    %v322 = vpop.trf.xlu0
    %v323 = vpop.trf.xlu0
    %v324 = vpop.trf.xlu0
    %v325 = vpop.trf.xlu0
    %v326 = vpop.trf.xlu0
    %v327 = vpop.trf.xlu0
    %v328 = vpop.trf.xlu0
    %329 = vxpose.xlu0.b32.start [1/16] %v77, 128
    %330 = vxpose.xlu0.b32.cont [2/16] %v78, 128
    %331 = vxpose.xlu0.b32.cont [3/16] 0.0, 128
    %332 = vxpose.xlu0.b32.cont [4/16] 0.0, 128
    %333 = vxpose.xlu0.b32.cont [5/16] 0.0, 128
    %334 = vxpose.xlu0.b32.cont [6/16] 0.0, 128
    %335 = vxpose.xlu0.b32.cont [7/16] 0.0, 128
    %336 = vxpose.xlu0.b32.cont [8/16] 0.0, 128
    %337 = vxpose.xlu0.b32.cont [9/16] 0.0, 128
    %338 = vxpose.xlu0.b32.cont [10/16] 0.0, 128
    %339 = vxpose.xlu0.b32.cont [11/16] 0.0, 128
    %340 = vxpose.xlu0.b32.cont [12/16] 0.0, 128
    %341 = vxpose.xlu0.b32.cont [13/16] 0.0, 128
    %342 = vxpose.xlu0.b32.cont [14/16] 0.0, 128
    %343 = vxpose.xlu0.b32.cont [15/16] 0.0, 128
    %344 = vxpose.xlu0.b32.end [16/16] 0.0, 128
    %v345 = vpop.trf.xlu0
    %v346 = vpop.trf.xlu0
    %v347 = vpop.trf.xlu0
    %v348 = vpop.trf.xlu0
    %v349 = vpop.trf.xlu0
    %v350 = vpop.trf.xlu0
    %v351 = vpop.trf.xlu0
    %v352 = vpop.trf.xlu0
    %v353 = vpop.trf.xlu0
    %v354 = vpop.trf.xlu0
    %v355 = vpop.trf.xlu0
    %v356 = vpop.trf.xlu0
    %v357 = vpop.trf.xlu0
    %v358 = vpop.trf.xlu0
    %v359 = vpop.trf.xlu0
    %v360 = vpop.trf.xlu0
    %vm361 = vcmask 130048
    %v363 = vsel %vm361, %v313, 0
    %v366 = vsel %vm361, %v314, 0
    %v369 = vsel %vm361, %v315, 0
    %v372 = vsel %vm361, %v316, 0
    %374 = vmatprep.subr.mxu0 0.0
    %375 = vmatpush1.msra.mxu0 %v293
    %376 = vmatprep.subr.mxu0 0.0
    %377 = vmatpush1.msra.mxu0 %v294
    %378 = vmatprep.subr.mxu0 0.0
    %379 = vmatpush1.msra.mxu0 0.0
    %380 = vmatprep.subr.mxu0 0.0
    %381 = vmatpush1.msra.mxu0 0.0
    %382 = vmatprep.subr.mxu0 0.0
    %383 = vmatpush1.msra.mxu0 0.0
    %384 = vmatprep.subr.mxu0 0.0
    %385 = vmatpush1.msra.mxu0 0.0
    %386 = vmatprep.subr.mxu0 0.0
    %387 = vmatpush1.msra.mxu0 0.0
    %388 = vmatprep.subr.mxu0 0.0
    %389 = vmatpush1.msra.mxu0 0.0
    %390 = vmatprep.subr.mxu0 0.0
    %391 = vmatpush1.msra.mxu0 0.0
    %392 = vmatprep.subr.mxu0 0.0
    %393 = vmatpush1.msra.mxu0 0.0
    %394 = vmatprep.subr.mxu0 0.0
    %395 = vmatpush1.msra.mxu0 0.0
    %396 = vmatprep.subr.mxu0 0.0
    %397 = vmatpush1.msra.mxu0 0.0
    %398 = vmatprep.subr.mxu0 0.0
    %399 = vmatpush1.msra.mxu0 0.0
    %400 = vmatprep.subr.mxu0 0.0
    %401 = vmatpush1.msra.mxu0 0.0
    %402 = vmatprep.subr.mxu0 0.0
    %403 = vmatpush1.msra.mxu0 0.0
    %404 = vmatprep.subr.mxu0 0.0
    %405 = vmatpush1.msra.mxu0 0.0
    %406 = vmatprep.subr.mxu0 0.0
    %407 = vmatpush1.msra.mxu0 0.0
    %408 = vmatprep.subr.mxu0 0.0
    %409 = vmatpush1.msra.mxu0 0.0
    %410 = vmatprep.subr.mxu0 0.0
    %411 = vmatpush1.msra.mxu0 0.0
    %412 = vmatprep.subr.mxu0 0.0
    %413 = vmatpush1.msra.mxu0 0.0
    %414 = vmatprep.subr.mxu0 0.0
    %415 = vmatpush1.msra.mxu0 0.0
    %416 = vmatprep.subr.mxu0 0.0
    %417 = vmatpush1.msra.mxu0 0.0
    %418 = vmatprep.subr.mxu0 0.0
    %419 = vmatpush1.msra.mxu0 0.0
    %420 = vmatprep.subr.mxu0 0.0
    %421 = vmatpush1.msra.mxu0 0.0
    %422 = vmatprep.subr.mxu0 0.0
    %423 = vmatpush1.msra.mxu0 0.0
    %424 = vmatprep.subr.mxu0 0.0
    %425 = vmatpush1.msra.mxu0 0.0
    %426 = vmatprep.subr.mxu0 0.0
    %427 = vmatpush1.msra.mxu0 0.0
    %428 = vmatprep.subr.mxu0 0.0
    %429 = vmatpush1.msra.mxu0 0.0
    %430 = vmatprep.subr.mxu0 0.0
    %431 = vmatpush1.msra.mxu0 0.0
    %432 = vmatprep.subr.mxu0 0.0
    %433 = vmatpush1.msra.mxu0 0.0
    %434 = vmatprep.subr.mxu0 0.0
    %435 = vmatpush1.msra.mxu0 0.0
    %436 = vmatprep.subr.mxu0 0.0
    %437 = vmatpush1.msra.mxu0 0.0
    %438 = vmatprep.mubr.f32.mxu0 0.0
    %439 = vmatmul.mubr.f32.gmra.mrb[0].mxu0 %v363
    %v440 = vpop.f32.mrb[0].mxu0
    %v441 = vadd.f32 0.0, %v440
    %v442 = vpop.f32.mrb[0].mxu0
    %443 = vmatprep.mubr.f32.mxu0 0.0
    %444 = vmatmul.mubr.f32.gmra.mrb[0].mxu0 %v366
    %v445 = vpop.f32.mrb[0].mxu0
    %v446 = vadd.f32 0.0, %v445
    %v447 = vpop.f32.mrb[0].mxu0
    %448 = vmatprep.mubr.f32.mxu0 0.0
    %449 = vmatmul.mubr.f32.gmra.mrb[0].mxu0 %v369
    %v450 = vpop.f32.mrb[0].mxu0
    %v451 = vadd.f32 0.0, %v450
    %v452 = vpop.f32.mrb[0].mxu0
    %453 = vmatprep.mubr.f32.mxu0 0.0
    %454 = vmatmul.mubr.f32.gmra.mrb[0].mxu0 %v372
    %v455 = vpop.f32.mrb[0].mxu0
    %v456 = vadd.f32 0.0, %v455
    %v457 = vpop.f32.mrb[0].mxu0
    %458 = vdwg.mxu0
    %v460 = vsel %vm361, %v345, 0
    %v463 = vsel %vm361, %v346, 0
    %v466 = vsel %vm361, %v347, 0
    %v469 = vsel %vm361, %v348, 0
    %471 = vmatprep.subr.mxu0 0.0
    %472 = vmatpush1.msra.mxu0 %v295
    %473 = vmatprep.subr.mxu0 0.0
    %474 = vmatpush1.msra.mxu0 %v296
    %475 = vmatprep.subr.mxu0 0.0
    %476 = vmatpush1.msra.mxu0 0.0
    %477 = vmatprep.subr.mxu0 0.0
    %478 = vmatpush1.msra.mxu0 0.0
    %479 = vmatprep.subr.mxu0 0.0
    %480 = vmatpush1.msra.mxu0 0.0
    %481 = vmatprep.subr.mxu0 0.0
    %482 = vmatpush1.msra.mxu0 0.0
    %483 = vmatprep.subr.mxu0 0.0
    %484 = vmatpush1.msra.mxu0 0.0
    %485 = vmatprep.subr.mxu0 0.0
    %486 = vmatpush1.msra.mxu0 0.0
    %487 = vmatprep.subr.mxu0 0.0
    %488 = vmatpush1.msra.mxu0 0.0
    %489 = vmatprep.subr.mxu0 0.0
    %490 = vmatpush1.msra.mxu0 0.0
    %491 = vmatprep.subr.mxu0 0.0
    %492 = vmatpush1.msra.mxu0 0.0
    %493 = vmatprep.subr.mxu0 0.0
    %494 = vmatpush1.msra.mxu0 0.0
    %495 = vmatprep.subr.mxu0 0.0
    %496 = vmatpush1.msra.mxu0 0.0
    %497 = vmatprep.subr.mxu0 0.0
    %498 = vmatpush1.msra.mxu0 0.0
    %499 = vmatprep.subr.mxu0 0.0
    %500 = vmatpush1.msra.mxu0 0.0
    %501 = vmatprep.subr.mxu0 0.0
    %502 = vmatpush1.msra.mxu0 0.0
    %503 = vmatprep.subr.mxu0 0.0
    %504 = vmatpush1.msra.mxu0 0.0
    %505 = vmatprep.subr.mxu0 0.0
    %506 = vmatpush1.msra.mxu0 0.0
    %507 = vmatprep.subr.mxu0 0.0
    %508 = vmatpush1.msra.mxu0 0.0
    %509 = vmatprep.subr.mxu0 0.0
    %510 = vmatpush1.msra.mxu0 0.0
    %511 = vmatprep.subr.mxu0 0.0
    %512 = vmatpush1.msra.mxu0 0.0
    %513 = vmatprep.subr.mxu0 0.0
    %514 = vmatpush1.msra.mxu0 0.0
    %515 = vmatprep.subr.mxu0 0.0
    %516 = vmatpush1.msra.mxu0 0.0
    %517 = vmatprep.subr.mxu0 0.0
    %518 = vmatpush1.msra.mxu0 0.0
    %519 = vmatprep.subr.mxu0 0.0
    %520 = vmatpush1.msra.mxu0 0.0
    %521 = vmatprep.subr.mxu0 0.0
    %522 = vmatpush1.msra.mxu0 0.0
    %523 = vmatprep.subr.mxu0 0.0
    %524 = vmatpush1.msra.mxu0 0.0
    %525 = vmatprep.subr.mxu0 0.0
    %526 = vmatpush1.msra.mxu0 0.0
    %527 = vmatprep.subr.mxu0 0.0
    %528 = vmatpush1.msra.mxu0 0.0
    %529 = vmatprep.subr.mxu0 0.0
    %530 = vmatpush1.msra.mxu0 0.0
    %531 = vmatprep.subr.mxu0 0.0
    %532 = vmatpush1.msra.mxu0 0.0
    %533 = vmatprep.subr.mxu0 0.0
    %534 = vmatpush1.msra.mxu0 0.0
    %535 = vmatprep.mubr.f32.mxu0 0.0
    %536 = vmatmul.mubr.f32.gmra.mrb[0].mxu0 %v460
    %v537 = vpop.f32.mrb[0].mxu0
    %v538 = vadd.f32 0.0, %v537
    %v539 = vpop.f32.mrb[0].mxu0
    %540 = vmatprep.mubr.f32.mxu0 0.0
    %541 = vmatmul.mubr.f32.gmra.mrb[0].mxu0 %v463
    %v542 = vpop.f32.mrb[0].mxu0
    %v543 = vadd.f32 0.0, %v542
    %v544 = vpop.f32.mrb[0].mxu0
    %545 = vmatprep.mubr.f32.mxu0 0.0
    %546 = vmatmul.mubr.f32.gmra.mrb[0].mxu0 %v466
    %v547 = vpop.f32.mrb[0].mxu0
    %v548 = vadd.f32 0.0, %v547
    %v549 = vpop.f32.mrb[0].mxu0
    %550 = vmatprep.mubr.f32.mxu0 0.0
    %551 = vmatmul.mubr.f32.gmra.mrb[0].mxu0 %v469
    %v552 = vpop.f32.mrb[0].mxu0
    %v553 = vadd.f32 0.0, %v552
    %v554 = vpop.f32.mrb[0].mxu0
    %555 = vdwg.mxu0
    %v556 = vld [vmem:[#allocation7] sm:$0xff]
    %v557 = vld [vmem:[#allocation7 + $0x8] sm:$0xff]
    %v558 = vld [vmem:[#allocation7 + $0x10] sm:$0xff]
    %v559 = vld [vmem:[#allocation7 + $0x18] sm:$0xff]
    %v560 = vmul.f32 %v441, %v556
    %v561 = vmul.f32 %v446, %v557
    %v562 = vmul.f32 %v451, %v558
    %v563 = vmul.f32 %v456, %v559
    %v564 = vmul.f32 %v538, %v556
    %v565 = vmul.f32 %v543, %v557
    %v566 = vmul.f32 %v548, %v558
    %v567 = vmul.f32 %v553, %v559
    %v568 = vsel %vm83, %v560, 0.0
    %569 = vadd.xlane.f32.xlu0 %v568
    %v570 = vpop.xlane.xlu0 %569
    %v571 = vsel %vm83, %v561, 0.0
    %572 = vadd.xlane.f32.xlu0 %v571
    %v573 = vpop.xlane.xlu0 %572
    %v574 = vsel %vm83, %v562, 0.0
    %575 = vadd.xlane.f32.xlu0 %v574
    %v576 = vpop.xlane.xlu0 %575
    %v577 = vsel %vm83, %v563, 0.0
    %578 = vadd.xlane.f32.xlu0 %v577
    %v579 = vpop.xlane.xlu0 %578
    %v580 = vsel %vm83, %v564, 0.0
    %581 = vadd.xlane.f32.xlu0 %v580
    %v582 = vpop.xlane.xlu0 %581
    %v583 = vsel %vm83, %v565, 0.0
    %584 = vadd.xlane.f32.xlu0 %v583
    %v585 = vpop.xlane.xlu0 %584
    %v586 = vsel %vm83, %v566, 0.0
    %587 = vadd.xlane.f32.xlu0 %v586
    %v588 = vpop.xlane.xlu0 %587
    %v589 = vsel %vm83, %v567, 0.0
    %590 = vadd.xlane.f32.xlu0 %v589
    %v591 = vpop.xlane.xlu0 %590
    %s592 = scalar_lea.vmem [#allocation7], 32
    %v593 = vld [vmem:[%s592] sm:$0xff]
    %v594 = vld [vmem:[%s592 + $0x8] sm:$0xff]
    %v595 = vld [vmem:[%s592 + $0x10] sm:$0xff]
    %v596 = vld [vmem:[%s592 + $0x18] sm:$0xff]
    %v597 = vmul.f32 %v441, %v593
    %v598 = vmul.f32 %v446, %v594
    %v599 = vmul.f32 %v451, %v595
    %v600 = vmul.f32 %v456, %v596
    %v601 = vmul.f32 %v538, %v593
    %v602 = vmul.f32 %v543, %v594
    %v603 = vmul.f32 %v548, %v595
    %v604 = vmul.f32 %v553, %v596
    %v605 = vsel %vm83, %v597, 0.0
    %606 = vadd.xlane.f32.xlu0 %v605
    %v607 = vpop.xlane.xlu0 %606
    %v608 = vsel %vm83, %v598, 0.0
    %609 = vadd.xlane.f32.xlu0 %v608
    %v610 = vpop.xlane.xlu0 %609
    %v611 = vsel %vm83, %v599, 0.0
    %612 = vadd.xlane.f32.xlu0 %v611
    %v613 = vpop.xlane.xlu0 %612
    %v614 = vsel %vm83, %v600, 0.0
    %615 = vadd.xlane.f32.xlu0 %v614
    %v616 = vpop.xlane.xlu0 %615
    %v617 = vsel %vm83, %v601, 0.0
    %618 = vadd.xlane.f32.xlu0 %v617
    %v619 = vpop.xlane.xlu0 %618
    %v620 = vsel %vm83, %v602, 0.0
    %621 = vadd.xlane.f32.xlu0 %v620
    %v622 = vpop.xlane.xlu0 %621
    %v623 = vsel %vm83, %v603, 0.0
    %624 = vadd.xlane.f32.xlu0 %v623
    %v625 = vpop.xlane.xlu0 %624
    %v626 = vsel %vm83, %v604, 0.0
    %627 = vadd.xlane.f32.xlu0 %v626
    %v628 = vpop.xlane.xlu0 %627
    %s629 = scalar_lea.vmem [#allocation7], 64
    %v630 = vld [vmem:[%s629] sm:$0xff]
    %v631 = vld [vmem:[%s629 + $0x8] sm:$0xff]
    %v632 = vld [vmem:[%s629 + $0x10] sm:$0xff]
    %v633 = vld [vmem:[%s629 + $0x18] sm:$0xff]
    %v634 = vmul.f32 %v441, %v630
    %v635 = vmul.f32 %v446, %v631
    %v636 = vmul.f32 %v451, %v632
    %v637 = vmul.f32 %v456, %v633
    %v638 = vmul.f32 %v538, %v630
    %v639 = vmul.f32 %v543, %v631
    %v640 = vmul.f32 %v548, %v632
    %v641 = vmul.f32 %v553, %v633
    %v642 = vsel %vm83, %v634, 0.0
    %643 = vadd.xlane.f32.xlu0 %v642
    %v644 = vpop.xlane.xlu0 %643
    %v645 = vsel %vm83, %v635, 0.0
    %646 = vadd.xlane.f32.xlu0 %v645
    %v647 = vpop.xlane.xlu0 %646
    %v648 = vsel %vm83, %v636, 0.0
    %649 = vadd.xlane.f32.xlu0 %v648
    %v650 = vpop.xlane.xlu0 %649
    %v651 = vsel %vm83, %v637, 0.0
    %652 = vadd.xlane.f32.xlu0 %v651
    %v653 = vpop.xlane.xlu0 %652
    %v654 = vsel %vm83, %v638, 0.0
    %655 = vadd.xlane.f32.xlu0 %v654
    %v656 = vpop.xlane.xlu0 %655
    %v657 = vsel %vm83, %v639, 0.0
    %658 = vadd.xlane.f32.xlu0 %v657
    %v659 = vpop.xlane.xlu0 %658
    %v660 = vsel %vm83, %v640, 0.0
    %661 = vadd.xlane.f32.xlu0 %v660
    %v662 = vpop.xlane.xlu0 %661
    %v663 = vsel %vm83, %v641, 0.0
    %664 = vadd.xlane.f32.xlu0 %v663
    %v665 = vpop.xlane.xlu0 %664
    %s666 = scalar_lea.vmem [#allocation7], 96
    %v667 = vld [vmem:[%s666] sm:$0xff]
    %v668 = vld [vmem:[%s666 + $0x8] sm:$0xff]
    %v669 = vld [vmem:[%s666 + $0x10] sm:$0xff]
    %v670 = vld [vmem:[%s666 + $0x18] sm:$0xff]
    %v671 = vmul.f32 %v441, %v667
    %v672 = vmul.f32 %v446, %v668
    %v673 = vmul.f32 %v451, %v669
    %v674 = vmul.f32 %v456, %v670
    %v675 = vmul.f32 %v538, %v667
    %v676 = vmul.f32 %v543, %v668
    %v677 = vmul.f32 %v548, %v669
    %v678 = vmul.f32 %v553, %v670
    %v679 = vsel %vm83, %v671, 0.0
    %680 = vadd.xlane.f32.xlu0 %v679
    %v681 = vpop.xlane.xlu0 %680
    %v682 = vsel %vm83, %v672, 0.0
    %683 = vadd.xlane.f32.xlu0 %v682
    %v684 = vpop.xlane.xlu0 %683
    %v685 = vsel %vm83, %v673, 0.0
    %686 = vadd.xlane.f32.xlu0 %v685
    %v687 = vpop.xlane.xlu0 %686
    %v688 = vsel %vm83, %v674, 0.0
    %689 = vadd.xlane.f32.xlu0 %v688
    %v690 = vpop.xlane.xlu0 %689
    %v691 = vsel %vm83, %v675, 0.0
    %692 = vadd.xlane.f32.xlu0 %v691
    %v693 = vpop.xlane.xlu0 %692
    %v694 = vsel %vm83, %v676, 0.0
    %695 = vadd.xlane.f32.xlu0 %v694
    %v696 = vpop.xlane.xlu0 %695
    %v697 = vsel %vm83, %v677, 0.0
    %698 = vadd.xlane.f32.xlu0 %v697
    %v699 = vpop.xlane.xlu0 %698
    %v700 = vsel %vm83, %v678, 0.0
    %701 = vadd.xlane.f32.xlu0 %v700
    %v702 = vpop.xlane.xlu0 %701
    %v711 = vlaneseq
    %v712 = vand.u32 %v711, 127
    %v713 = vlaneseq
    %v714 = vshrl.u32 %v713, 7
    %v715 = vsub.s32 %v712, %v714
    %v716 = vrot.slane %v570, %v715
    %v717 = vadd.s32 %v712, 4294967288
    %v718 = vlaneseq
    %v719 = vshrl.u32 %v718, 7
    %v720 = vsub.s32 %v717, %v719
    %v721 = vrot.slane %v573, %v720
    %vm722 = vcmask 130112
    %v723 = vsel %vm722, %v721, %v716
    %v724 = vadd.s32 %v712, 4294967280
    %v725 = vlaneseq
    %v726 = vshrl.u32 %v725, 7
    %v727 = vsub.s32 %v724, %v726
    %v728 = vrot.slane %v576, %v727
    %vm729 = vcmask 195712
    %v730 = vsel %vm729, %v728, %v723
    %v731 = vadd.s32 %v712, 4294967272
    %v732 = vlaneseq
    %v733 = vshrl.u32 %v732, 7
    %v734 = vsub.s32 %v731, %v733
    %v735 = vrot.slane %v579, %v734
    %vm736 = vcmask 261312
    %v737 = vsel %vm736, %v735, %v730
    %v738 = vlaneseq
    %v739 = vshrl.u32 %v738, 7
    %v740 = vsub.s32 %v712, %v739
    %v741 = vrot.slane %v582, %v740
    %v742 = vlaneseq
    %v743 = vshrl.u32 %v742, 7
    %v744 = vsub.s32 %v717, %v743
    %v745 = vrot.slane %v585, %v744
    %v746 = vsel %vm722, %v745, %v741
    %v747 = vlaneseq
    %v748 = vshrl.u32 %v747, 7
    %v749 = vsub.s32 %v724, %v748
    %v750 = vrot.slane %v588, %v749
    %v751 = vsel %vm729, %v750, %v746
    %v752 = vlaneseq
    %v753 = vshrl.u32 %v752, 7
    %v754 = vsub.s32 %v731, %v753
    %v755 = vrot.slane %v591, %v754
    %v756 = vsel %vm736, %v755, %v751
    %v757 = vsel %vm204, %v756, %v737
    %v767 = vadd.s32 %v712, 4294967264
    %v768 = vlaneseq
    %v769 = vshrl.u32 %v768, 7
    %v770 = vsub.s32 %v767, %v769
    %v771 = vrot.slane %v607, %v770
    %v772 = vadd.s32 %v712, 4294967256
    %v773 = vlaneseq
    %v774 = vshrl.u32 %v773, 7
    %v775 = vsub.s32 %v772, %v774
    %v776 = vrot.slane %v610, %v775
    %vm777 = vcmask 392512
    %v778 = vsel %vm777, %v776, %v771
    %v779 = vadd.s32 %v712, 4294967248
    %v780 = vlaneseq
    %v781 = vshrl.u32 %v780, 7
    %v782 = vsub.s32 %v779, %v781
    %v783 = vrot.slane %v613, %v782
    %vm784 = vcmask 458112
    %v785 = vsel %vm784, %v783, %v778
    %v786 = vadd.s32 %v712, 4294967240
    %v787 = vlaneseq
    %v788 = vshrl.u32 %v787, 7
    %v789 = vsub.s32 %v786, %v788
    %v790 = vrot.slane %v616, %v789
    %vm791 = vcmask 523712
    %v792 = vsel %vm791, %v790, %v785
    %v793 = vlaneseq
    %v794 = vshrl.u32 %v793, 7
    %v795 = vsub.s32 %v767, %v794
    %v796 = vrot.slane %v619, %v795
    %v797 = vlaneseq
    %v798 = vshrl.u32 %v797, 7
    %v799 = vsub.s32 %v772, %v798
    %v800 = vrot.slane %v622, %v799
    %v801 = vsel %vm777, %v800, %v796
    %v802 = vlaneseq
    %v803 = vshrl.u32 %v802, 7
    %v804 = vsub.s32 %v779, %v803
    %v805 = vrot.slane %v625, %v804
    %v806 = vsel %vm784, %v805, %v801
    %v807 = vlaneseq
    %v808 = vshrl.u32 %v807, 7
    %v809 = vsub.s32 %v786, %v808
    %v810 = vrot.slane %v628, %v809
    %v811 = vsel %vm791, %v810, %v806
    %v812 = vsel %vm204, %v811, %v792
    %v822 = vadd.s32 %v712, 4294967232
    %v823 = vlaneseq
    %v824 = vshrl.u32 %v823, 7
    %v825 = vsub.s32 %v822, %v824
    %v826 = vrot.slane %v644, %v825
    %v827 = vadd.s32 %v712, 4294967224
    %v828 = vlaneseq
    %v829 = vshrl.u32 %v828, 7
    %v830 = vsub.s32 %v827, %v829
    %v831 = vrot.slane %v647, %v830
    %vm832 = vcmask 654912
    %v833 = vsel %vm832, %v831, %v826
    %v834 = vadd.s32 %v712, 4294967216
    %v835 = vlaneseq
    %v836 = vshrl.u32 %v835, 7
    %v837 = vsub.s32 %v834, %v836
    %v838 = vrot.slane %v650, %v837
    %vm839 = vcmask 720512
    %v840 = vsel %vm839, %v838, %v833
    %v841 = vadd.s32 %v712, 4294967208
    %v842 = vlaneseq
    %v843 = vshrl.u32 %v842, 7
    %v844 = vsub.s32 %v841, %v843
    %v845 = vrot.slane %v653, %v844
    %vm846 = vcmask 786112
    %v847 = vsel %vm846, %v845, %v840
    %v848 = vlaneseq
    %v849 = vshrl.u32 %v848, 7
    %v850 = vsub.s32 %v822, %v849
    %v851 = vrot.slane %v656, %v850
    %v852 = vlaneseq
    %v853 = vshrl.u32 %v852, 7
    %v854 = vsub.s32 %v827, %v853
    %v855 = vrot.slane %v659, %v854
    %v856 = vsel %vm832, %v855, %v851
    %v857 = vlaneseq
    %v858 = vshrl.u32 %v857, 7
    %v859 = vsub.s32 %v834, %v858
    %v860 = vrot.slane %v662, %v859
    %v861 = vsel %vm839, %v860, %v856
    %v862 = vlaneseq
    %v863 = vshrl.u32 %v862, 7
    %v864 = vsub.s32 %v841, %v863
    %v865 = vrot.slane %v665, %v864
    %v866 = vsel %vm846, %v865, %v861
    %v867 = vsel %vm204, %v866, %v847
    %v877 = vadd.s32 %v712, 4294967200
    %v878 = vlaneseq
    %v879 = vshrl.u32 %v878, 7
    %v880 = vsub.s32 %v877, %v879
    %v881 = vrot.slane %v681, %v880
    %v882 = vadd.s32 %v712, 4294967192
    %v883 = vlaneseq
    %v884 = vshrl.u32 %v883, 7
    %v885 = vsub.s32 %v882, %v884
    %v886 = vrot.slane %v684, %v885
    %vm887 = vcmask 917312
    %v888 = vsel %vm887, %v886, %v881
    %v889 = vadd.s32 %v712, 4294967184
    %v890 = vlaneseq
    %v891 = vshrl.u32 %v890, 7
    %v892 = vsub.s32 %v889, %v891
    %v893 = vrot.slane %v687, %v892
    %vm894 = vcmask 982912
    %v895 = vsel %vm894, %v893, %v888
    %v896 = vadd.s32 %v712, 4294967176
    %v897 = vlaneseq
    %v898 = vshrl.u32 %v897, 7
    %v899 = vsub.s32 %v896, %v898
    %v900 = vrot.slane %v690, %v899
    %vm901 = vcmask 1048512
    %v902 = vsel %vm901, %v900, %v895
    %v903 = vlaneseq
    %v904 = vshrl.u32 %v903, 7
    %v905 = vsub.s32 %v877, %v904
    %v906 = vrot.slane %v693, %v905
    %v907 = vlaneseq
    %v908 = vshrl.u32 %v907, 7
    %v909 = vsub.s32 %v882, %v908
    %v910 = vrot.slane %v696, %v909
    %v911 = vsel %vm887, %v910, %v906
    %v912 = vlaneseq
    %v913 = vshrl.u32 %v912, 7
    %v914 = vsub.s32 %v889, %v913
    %v915 = vrot.slane %v699, %v914
    %v916 = vsel %vm894, %v915, %v911
    %v917 = vlaneseq
    %v918 = vshrl.u32 %v917, 7
    %v919 = vsub.s32 %v896, %v918
    %v920 = vrot.slane %v702, %v919
    %v921 = vsel %vm901, %v920, %v916
    %v922 = vsel %vm204, %v921, %v902
    %v924 = vsel %vm83, %v757, %v812
    %vm925 = vcmask 523264
    %v926 = vsel %vm925, %v924, %v867
    %vm927 = vcmask 785408
    %v928 = vsel %vm927, %v926, %v922
    %v929 = vld [vmem:[#allocation8] sm:$0xff]
    %v930 = vld [vmem:[#allocation8 + $0x8] sm:$0xff]
    %v931 = vld [vmem:[#allocation8 + $0x10] sm:$0xff]
    %v932 = vld [vmem:[#allocation8 + $0x18] sm:$0xff]
    %v933 = vld [vmem:[#allocation8 + $0x20] sm:$0xff]
    %v934 = vld [vmem:[#allocation8 + $0x28] sm:$0xff]
    %v935 = vld [vmem:[#allocation8 + $0x30] sm:$0xff]
    %v936 = vld [vmem:[#allocation8 + $0x38] sm:$0xff]
    %v937 = vld [vmem:[#allocation8 + $0x40] sm:$0xff]
    %v938 = vld [vmem:[#allocation8 + $0x48] sm:$0xff]
    %v939 = vld [vmem:[#allocation8 + $0x50] sm:$0xff]
    %v940 = vld [vmem:[#allocation8 + $0x58] sm:$0xff]
    %v941 = vld [vmem:[#allocation8 + $0x60] sm:$0xff]
    %v942 = vld [vmem:[#allocation8 + $0x68] sm:$0xff]
    %v943 = vld [vmem:[#allocation8 + $0x70] sm:$0xff]
    %v944 = vld [vmem:[#allocation8 + $0x78] sm:$0xff]
    %945 = vmatprep.subr.mxu0 0.0
    %946 = vmatpush1.msra.mxu0 %v929
    %947 = vmatprep.subr.mxu0 0.0
    %948 = vmatpush1.msra.mxu0 %v930
    %949 = vmatprep.subr.mxu0 0.0
    %950 = vmatpush1.msra.mxu0 %v931
    %951 = vmatprep.subr.mxu0 0.0
    %952 = vmatpush1.msra.mxu0 %v932
    %953 = vmatprep.subr.mxu0 0.0
    %954 = vmatpush1.msra.mxu0 %v933
    %955 = vmatprep.subr.mxu0 0.0
    %956 = vmatpush1.msra.mxu0 %v934
    %957 = vmatprep.subr.mxu0 0.0
    %958 = vmatpush1.msra.mxu0 %v935
    %959 = vmatprep.subr.mxu0 0.0
    %960 = vmatpush1.msra.mxu0 %v936
    %961 = vmatprep.subr.mxu0 0.0
    %962 = vmatpush1.msra.mxu0 %v937
    %963 = vmatprep.subr.mxu0 0.0
    %964 = vmatpush1.msra.mxu0 %v938
    %965 = vmatprep.subr.mxu0 0.0
    %966 = vmatpush1.msra.mxu0 %v939
    %967 = vmatprep.subr.mxu0 0.0
    %968 = vmatpush1.msra.mxu0 %v940
    %969 = vmatprep.subr.mxu0 0.0
    %970 = vmatpush1.msra.mxu0 %v941
    %971 = vmatprep.subr.mxu0 0.0
    %972 = vmatpush1.msra.mxu0 %v942
    %973 = vmatprep.subr.mxu0 0.0
    %974 = vmatpush1.msra.mxu0 %v943
    %975 = vmatprep.subr.mxu0 0.0
    %976 = vmatpush1.msra.mxu0 %v944
    %977 = vmatprep.subr.mxu0 0.0
    %978 = vmatpush1.msra.mxu0 0.0
    %979 = vmatprep.subr.mxu0 0.0
    %980 = vmatpush1.msra.mxu0 0.0
    %981 = vmatprep.subr.mxu0 0.0
    %982 = vmatpush1.msra.mxu0 0.0
    %983 = vmatprep.subr.mxu0 0.0
    %984 = vmatpush1.msra.mxu0 0.0
    %985 = vmatprep.subr.mxu0 0.0
    %986 = vmatpush1.msra.mxu0 0.0
    %987 = vmatprep.subr.mxu0 0.0
    %988 = vmatpush1.msra.mxu0 0.0
    %989 = vmatprep.subr.mxu0 0.0
    %990 = vmatpush1.msra.mxu0 0.0
    %991 = vmatprep.subr.mxu0 0.0
    %992 = vmatpush1.msra.mxu0 0.0
    %993 = vmatprep.subr.mxu0 0.0
    %994 = vmatpush1.msra.mxu0 0.0
    %995 = vmatprep.subr.mxu0 0.0
    %996 = vmatpush1.msra.mxu0 0.0
    %997 = vmatprep.subr.mxu0 0.0
    %998 = vmatpush1.msra.mxu0 0.0
    %999 = vmatprep.subr.mxu0 0.0
    %1000 = vmatpush1.msra.mxu0 0.0
    %1001 = vmatprep.subr.mxu0 0.0
    %1002 = vmatpush1.msra.mxu0 0.0
    %1003 = vmatprep.subr.mxu0 0.0
    %1004 = vmatpush1.msra.mxu0 0.0
    %1005 = vmatprep.subr.mxu0 0.0
    %1006 = vmatpush1.msra.mxu0 0.0
    %1007 = vmatprep.subr.mxu0 0.0
    %1008 = vmatpush1.msra.mxu0 0.0
    %1009 = vmatprep.mubr.f32.mxu0 0.0
    %1010 = vmatmul.mubr.f32.gmra.mrb[0].mxu0 %v928
    %v1011 = vpop.f32.mrb[0].mxu0
    %v1012 = vadd.f32 0.0, %v1011
    %v1013 = vpop.f32.mrb[0].mxu0
    %1014 = vdwg.mxu0
    %1015 = vst [vmem:[%s5] sm:$0x3] %v1012
    // Predicated region
    $region34: #{object_neck_gru_forward.1} parent=1 // pred_check
      _
    $region35: #{object_neck_gru_forward.1} parent=1 // pred_check_branch
      %1017 = sbr.rel (0) target = $region37
    $region36: #{object_neck_gru_forward.1} parent=1 // pred_region
      %s1019 = ssub.s32 32, 32
      %1020 = vsyncadd [#allocation4], %s1019
      %s1022 = sshll.u32 [#allocation10], 4
      %s1023 = int_to_ptr.vmem [resolvable:$true] %s1022
      %1025 = dma.vmem_to_hbm [thread:$0]  %s1023, 32, %s4, [#allocation4]
    $region37: #{object_neck_gru_forward.1} parent=1 // pred_fallthru
      _
    // Predicated region
    $region38: #{object_neck_gru_forward.1} parent=1 // pred_check
      _
    $region39: #{object_neck_gru_forward.1} parent=1 // pred_check_branch
      %1027 = sbr.rel (0) target = $region41
    $region40: #{object_neck_gru_forward.1} parent=1 // pred_region
      _
    $region41: #{object_neck_gru_forward.1} parent=1 // pred_fallthru
      _
    // Predicated region
    $region42: #{object_neck_gru_forward.1} parent=1 // pred_check
      _
    $region43: #{object_neck_gru_forward.1} parent=1 // pred_check_branch
      %1029 = sbr.rel (0) target = $region45
    $region44: #{object_neck_gru_forward.1} parent=1 // pred_region
      %1030 = dma.done [#allocation4], 32
    $region45: #{object_neck_gru_forward.1} parent=1 // pred_fallthru
      _
    // Predicated region
    $region46: #{object_neck_gru_forward.1} parent=1 // pred_check
      _
    $region47: #{object_neck_gru_forward.1} parent=1 // pred_check_branch
      %1032 = sbr.rel (0) target = $region49
    $region48: #{object_neck_gru_forward.1} parent=1 // pred_region
      _
    $region49: #{object_neck_gru_forward.1} parent=1 // pred_fallthru
      _
    %1033 = vsyncpa [#allocation3], 1
    %1034 = vsyncpa [#allocation6], 1
    %1035 = vsyncpa [#allocation9], 1
    %1036 = vsyncpa [#allocation4], 1

</llo_original>
